<compile_context>
chip_gen: v6e
topology: v6e:2x2x1
jax: 0.10.0
libtpu: 0.0.40
codegen_flags: <defaults>
</compile_context>

<pallas_src>
import math
import functools

import jax
import jax.numpy as jnp
from jax import lax
from jax.experimental import pallas as pl
from jax.experimental.pallas import tpu as pltpu


_NEG_INF = -1e30  # finite "masked" score; keeps online softmax NaN-free


@functools.lru_cache(maxsize=1)
def _vmem_limit_bytes():
    """Per-generation scoped-VMEM limit: ~3/4 of physical, capped at 112 MiB."""
    cap = 64 * 1024 * 1024  # conservative fallback (works on every generation)
    try:
        cap = int(pltpu.get_tpu_info().vmem_capacity_bytes)
    except Exception:
        pass
    limit = min((cap * 3) // 4, 112 * 1024 * 1024)
    return int(max(limit, 32 * 1024 * 1024))


# ----------------------------------------------------------------------------
# Linear kernel: out = x @ W + b, tiled over rows (M); weights stay resident.
# x: (tm, F_in) (cast to bf16 in VMEM if needed), W: (F_in, F_out) bf16,
# b: (1, F_out) f32, out: (tm, F_out) out_dtype -- f32 accumulation on the MXU.
# ----------------------------------------------------------------------------
def _linear_kernel(x_ref, w_ref, b_ref, o_ref):
    x = x_ref[...].astype(jnp.bfloat16)   # no-op when the activation is already bf16
    acc = jnp.dot(x, w_ref[...], preferred_element_type=jnp.float32)
    o_ref[...] = (acc + b_ref[...]).astype(o_ref.dtype)


def pallas_linear(x, w, b, *, out_dtype=None, block_rows=1024):
    M, F_in = x.shape
    F_out = w.shape[1]
    out_dtype = out_dtype or x.dtype
    b2 = b.reshape(1, F_out).astype(jnp.float32)

    tm = M if M <= block_rows else block_rows
    grid = (pl.cdiv(M, tm),)

    return pl.pallas_call(
        _linear_kernel,
        out_shape=jax.ShapeDtypeStruct((M, F_out), out_dtype),
        grid=grid,
        in_specs=[
            pl.BlockSpec((tm, F_in), lambda i: (i, 0)),
            pl.BlockSpec((F_in, F_out), lambda i: (0, 0)),   # resident weights
            pl.BlockSpec((1, F_out), lambda i: (0, 0)),      # resident bias
        ],
        out_specs=pl.BlockSpec((tm, F_out), lambda i: (i, 0)),
        compiler_params=pltpu.CompilerParams(
            dimension_semantics=("parallel",),
            vmem_limit_bytes=_vmem_limit_bytes(),
        ),
    )(x, w, b2)


# ----------------------------------------------------------------------------
# Flash attention kernel. Grid = (B, H, q-tiles, kv-chunks); KV axis is "arbitrary".
# q: (tq, dk) bf16 (1/sqrt(dk) already folded into the Q projection),
# k/v: (tk, dk) bf16, mask: (tqm, tk) int8 (1 = keep), out: (tq, dk) bf16.
# Online-softmax statistics m/l and the context accumulator live in VMEM scratch.
# ----------------------------------------------------------------------------
def _flash_attn_kernel(q_ref, k_ref, v_ref, mask_ref, o_ref, m_sc, l_sc, acc_sc):
    ki = pl.program_id(3)

    @pl.when(ki == 0)
    def _():
        m_sc[...] = jnp.full_like(m_sc, _NEG_INF)
        l_sc[...] = jnp.zeros_like(l_sc)
        acc_sc[...] = jnp.zeros_like(acc_sc)

    q = q_ref[...]                       # (tq, dk) bf16
    k = k_ref[...]                       # (tk, dk) bf16
    v = v_ref[...]                       # (tk, dk) bf16
    live = mask_ref[...] != 0            # (tqm, tk) bool, broadcasts over q rows

    # q @ k^T via contraction on d_k (no transposed K tile); f32 accumulation.
    s = lax.dot_general(q, k, (((1,), (1,)), ((), ())),
                        preferred_element_type=jnp.float32)      # (tq, tk)
    s = jnp.where(live, s, _NEG_INF)

    m_prev = m_sc[...]                                            # (tq, 1)
    m_new = jnp.maximum(m_prev, jnp.max(s, axis=-1, keepdims=True))
    alpha = jnp.exp(m_prev - m_new)                               # finite by design
    p = jnp.exp(s - m_new)                                        # (tq, tk)
    l_sc[...] = alpha * l_sc[...] + jnp.sum(p, axis=-1, keepdims=True)
    acc_sc[...] = alpha * acc_sc[...] + jnp.dot(
        p.astype(jnp.bfloat16), v, preferred_element_type=jnp.float32)
    m_sc[...] = m_new

    @pl.when(ki == pl.num_programs(3) - 1)
    def _():
        # torch semantics: rows with no kept key at all -> zero context.
        dead = m_sc[...] <= _NEG_INF * 0.5
        out = acc_sc[...] * pl.reciprocal(l_sc[...], approx=True)
        o_ref[...] = jnp.where(dead, 0.0, out).astype(o_ref.dtype)


def pallas_flash_attention(q, k, v, mask, *, q_block=128, kv_block=512):
    """q: (B,H,T1,dk) bf16, k/v: (B,H,T2,dk) bf16, mask: (B,Tm,T2) int8 (Tm in {1,T1}).
    Returns ctx (B,H,T1,dk) bf16."""
    B, H, T1, dk = q.shape
    T2 = k.shape[2]

    tq = T1 if T1 <= q_block else q_block          # full block when small
    tk = T2 if T2 <= kv_block else kv_block        # kv chunk: 512 (multiple of 256)

    # Pad to tile multiples; padded keys are masked out, padded q rows are discarded.
    T1p = pl.cdiv(T1, tq) * tq
    T2p = pl.cdiv(T2, tk) * tk
    if T1p != T1:
        q = jnp.pad(q, ((0, 0), (0, 0), (0, T1p - T1), (0, 0)))
        if mask.shape[1] != 1:
            mask = jnp.pad(mask, ((0, 0), (0, T1p - T1), (0, 0)))
    if T2p != T2:
        k = jnp.pad(k, ((0, 0), (0, 0), (0, T2p - T2), (0, 0)))
        v = jnp.pad(v, ((0, 0), (0, 0), (0, T2p - T2), (0, 0)))
        mask = jnp.pad(mask, ((0, 0), (0, 0), (0, T2p - T2)))   # pad keys masked (0)

    Tm = mask.shape[1]                              # 1 or T1p
    tqm = 1 if Tm == 1 else tq
    if Tm == 1:
        mask_index = lambda b, h, qi, ki: (b, 0, ki)
    else:
        mask_index = lambda b, h, qi, ki: (b, qi, ki)

    grid = (B, H, T1p // tq, T2p // tk)

    out = pl.pallas_call(
        _flash_attn_kernel,
        out_shape=jax.ShapeDtypeStruct((B, H, T1p, dk), q.dtype),
        grid=grid,
        in_specs=[
            pl.BlockSpec((None, None, tq, dk), lambda b, h, qi, ki: (b, h, qi, 0)),
            pl.BlockSpec((None, None, tk, dk), lambda b, h, qi, ki: (b, h, ki, 0)),
            pl.BlockSpec((None, None, tk, dk), lambda b, h, qi, ki: (b, h, ki, 0)),
            pl.BlockSpec((None, tqm, tk), mask_index),
        ],
        out_specs=pl.BlockSpec((None, None, tq, dk), lambda b, h, qi, ki: (b, h, qi, 0)),
        scratch_shapes=[
            pltpu.VMEM((tq, 1), jnp.float32),    # running max m
            pltpu.VMEM((tq, 1), jnp.float32),    # running denom l
            pltpu.VMEM((tq, dk), jnp.float32),   # context accumulator
        ],
        compiler_params=pltpu.CompilerParams(
            dimension_semantics=("parallel", "parallel", "parallel", "arbitrary"),
            vmem_limit_bytes=_vmem_limit_bytes(),
        ),
    )(q, k, v, mask)

    if T1p != T1:
        out = out[:, :, :T1, :]
    return out


# ----------------------------------------------------------------------------
# Parameters
# ----------------------------------------------------------------------------
def init_mha_params(key, n_feat):
    """Deterministic synthetic f32 params. Weights stored as (in, out), i.e. already
    transposed relative to torch nn.Linear.weight."""
    ks = jax.random.split(key, 8)
    bound = 1.0 / math.sqrt(n_feat)
    u = lambda k, shape: jax.random.uniform(k, shape, jnp.float32, -bound, bound)
    return {
        "Wq": u(ks[0], (n_feat, n_feat)), "bq": u(ks[1], (n_feat,)),
        "Wk": u(ks[2], (n_feat, n_feat)), "bk": u(ks[3], (n_feat,)),
        "Wv": u(ks[4], (n_feat, n_feat)), "bv": u(ks[5], (n_feat,)),
        "Wo": u(ks[6], (n_feat, n_feat)), "bo": u(ks[7], (n_feat,)),
    }


def prepare_mha_params(raw, n_head):
    """One-time prep: fold 1/sqrt(d_k) into the Q projection, cast weights to bf16,
    pre-concatenate fused QKV / KV weight matrices."""
    F = raw["Wq"].shape[0]
    dk = F // n_head
    scale = 1.0 / math.sqrt(dk)
    Wq, bq = raw["Wq"] * scale, raw["bq"] * scale
    bf16, f32 = jnp.bfloat16, jnp.float32
    return {
        "Wq": Wq.astype(bf16), "bq": bq.astype(f32),
        "Wk": raw["Wk"].astype(bf16), "bk": raw["bk"].astype(f32),
        "Wv": raw["Wv"].astype(bf16), "bv": raw["bv"].astype(f32),
        "Wo": raw["Wo"].astype(bf16), "bo": raw["bo"].astype(f32),
        "Wqkv": jnp.concatenate([Wq, raw["Wk"], raw["Wv"]], axis=1).astype(bf16),
        "bqkv": jnp.concatenate([bq, raw["bk"], raw["bv"]]).astype(f32),
        "Wkv": jnp.concatenate([raw["Wk"], raw["Wv"]], axis=1).astype(bf16),
        "bkv": jnp.concatenate([raw["bk"], raw["bv"]]).astype(f32),
    }


# ----------------------------------------------------------------------------
# Full MultiHeadedAttention forward
# ----------------------------------------------------------------------------
def multi_headed_attention(params, query, key, value, n_head, mask=None, cache=None):
    """query/key/value: (B, T, n_feat). mask: (B,1,T2) / (B,T1,T2) (nonzero = keep) or
    None. cache: (B_c, H, cache_t, 2*d_k) or None. Returns (out (B,T1,n_feat) in
    query.dtype, new_cache (B, H, cache_t+T2, 2*d_k) bf16)."""
    B, T1, F = query.shape
    T2 = key.shape[1]
    H = n_head
    dk = F // H
    bf16 = jnp.bfloat16

    # --- projections: fused where inputs alias, bf16 activations out ---
    if (query is key) and (key is value):
        qkv = pallas_linear(query.reshape(B * T1, F), params["Wqkv"], params["bqkv"],
                            out_dtype=bf16)                                   # (B*T1, 3F)
        q_btf = qkv[:, :F].reshape(B, T1, F)
        k_btf = qkv[:, F:2 * F].reshape(B, T2, F)
        v_btf = qkv[:, 2 * F:].reshape(B, T2, F)
    elif key is value:
        q_btf = pallas_linear(query.reshape(B * T1, F), params["Wq"], params["bq"],
                              out_dtype=bf16).reshape(B, T1, F)
        kv = pallas_linear(key.reshape(B * T2, F), params["Wkv"], params["bkv"],
                           out_dtype=bf16)                                    # (B*T2, 2F)
        k_btf = kv[:, :F].reshape(B, T2, F)
        v_btf = kv[:, F:].reshape(B, T2, F)
    else:
        q_btf = pallas_linear(query.reshape(B * T1, F), params["Wq"], params["bq"],
                              out_dtype=bf16).reshape(B, T1, F)
        k_btf = pallas_linear(key.reshape(B * T2, F), params["Wk"], params["bk"],
                              out_dtype=bf16).reshape(B, T2, F)
        v_btf = pallas_linear(value.reshape(B * T2, F), params["Wv"], params["bv"],
                              out_dtype=bf16).reshape(B, T2, F)

    # (B, H, T, d_k) layout (required by the cache contract and the flash kernel).
    q_bhtd = q_btf.reshape(B, T1, H, dk).transpose(0, 2, 1, 3)
    k_bhtd = k_btf.reshape(B, T2, H, dk).transpose(0, 2, 1, 3)
    v_bhtd = v_btf.reshape(B, T2, H, dk).transpose(0, 2, 1, 3)

    if cache is not None and cache.shape[0] > 0:
        key_cache, value_cache = jnp.split(cache.astype(bf16), 2, axis=-1)
        k_bhtd = jnp.concatenate([key_cache, k_bhtd], axis=2)
        v_bhtd = jnp.concatenate([value_cache, v_bhtd], axis=2)
    new_cache = jnp.concatenate([k_bhtd, v_bhtd], axis=-1)
    T2_total = k_bhtd.shape[2]

    # --- compact key mask (int8, 1 = keep); cached key positions assumed valid ---
    if mask is None or mask.shape[-1] == 0:
        mask_i8 = jnp.ones((B, 1, T2_total), jnp.int8)   # "fake mask" => no masking
    else:
        m = (mask != 0).astype(jnp.int8)
        if m.shape[-1] > T2_total:
            m = m[:, :, :T2_total]
        elif m.shape[-1] < T2_total:
            m = jnp.pad(m, ((0, 0), (0, 0), (T2_total - m.shape[-1], 0)),
                        constant_values=1)               # cached keys always valid
        mask_i8 = m

    # --- flash attention: scores + masked online softmax + P@V ---
    # TODO(synk): dropout on attention probabilities is identity (inference semantics).
    ctx = pallas_flash_attention(q_bhtd, k_bhtd, v_bhtd, mask_i8)   # (B,H,T1,dk) bf16

    ctx_btf = ctx.transpose(0, 2, 1, 3).reshape(B * T1, F)
    out = pallas_linear(ctx_btf, params["Wo"], params["bo"],
                        out_dtype=query.dtype).reshape(B, T1, F)
    return out, new_cache


# ----------------------------------------------------------------------------
# Pure-JAX reference (torch semantics) for correctness checking
# ----------------------------------------------------------------------------
def _reference_mha(raw, query, key, value, n_head, mask=None, cache=None):
    B, T1, F = query.shape
    H, dk = n_head, F // n_head
    lin = lambda x, w, b: x @ w + b
    q = lin(query, raw["Wq"], raw["bq"]).reshape(B, T1, H, dk).transpose(0, 2, 1, 3)
    k = lin(key, raw["Wk"], raw["bk"]).reshape(B, -1, H, dk).transpose(0, 2, 1, 3)
    v = lin(value, raw["Wv"], raw["bv"]).reshape(B, -1, H, dk).transpose(0, 2, 1, 3)
    if cache is not None and cache.shape[0] > 0:
        kc, vc = jnp.split(cache, 2, axis=-1)
        k = jnp.concatenate([kc, k], axis=2)
        v = jnp.concatenate([vc, v], axis=2)
    scores = jnp.einsum("bhqd,bhkd->bhqk", q, k) / math.sqrt(dk)
    T2t = k.shape[2]
    if mask is not None and mask.shape[-1] > 0:
        m = (mask != 0)
        if m.shape[-1] > T2t:
            m = m[:, :, :T2t]
        elif m.shape[-1] < T2t:
            m = jnp.pad(m, ((0, 0), (0, 0), (T2t - m.shape[-1], 0)), constant_values=True)
        m = m[:, None, :, :]
        scores = jnp.where(m, scores, -jnp.inf)
        attn = jax.nn.softmax(scores, axis=-1)
        attn = jnp.where(m, attn, 0.0)
    else:
        attn = jax.nn.softmax(scores, axis=-1)
    ctx = jnp.einsum("bhqk,bhkd->bhqd", attn, v).transpose(0, 2, 1, 3).reshape(B, T1, F)
    return lin(ctx, raw["Wo"], raw["bo"])


if __name__ == "__main__":
    n_head, n_feat = 4, 32
    B, T1, T2 = 2, 8, 8
    dk = n_feat // n_head

    root = jax.random.PRNGKey(0)
    kp, kq, kk, kc = jax.random.split(root, 4)

    raw = init_mha_params(kp, n_feat)
    params = prepare_mha_params(raw, n_head)

    # Case 1: cross-attention style (key is value), padding mask keeps first 6 keys.
    query = jax.random.normal(kq, (B, T1, n_feat), jnp.float32)
    kv_in = jax.random.normal(kk, (B, T2, n_feat), jnp.float32)
    mask = (jnp.arange(T2)[None, None, :] < 6).astype(jnp.float32) * jnp.ones((B, 1, 1))

    out, new_cache = multi_headed_attention(params, query, kv_in, kv_in, n_head,
                                            mask=mask, cache=None)
    jax.block_until_ready(out)
    jax.block_until_ready(new_cache)
    assert out.shape == (B, T1, n_feat)
    assert new_cache.shape == (B, n_head, T2, 2 * dk)
    ref1 = _reference_mha(raw, query, kv_in, kv_in, n_head, mask=mask, cache=None)
    assert bool(jnp.allclose(out.astype(jnp.float32), ref1, rtol=5e-2, atol=5e-2))

    # Case 2: self-attention (fused QKV) with a KV cache; mask only covers the new
    # keys, exercising the mask-padding path for cached positions.
    xb = jax.random.normal(kc, (1, T1, n_feat), jnp.float32)
    cache_t = 8
    cache = jax.random.normal(jax.random.PRNGKey(1), (1, n_head, cache_t, 2 * dk),
                              jnp.float32)
    mask2 = jnp.ones((1, 1, T1), jnp.float32)
    out2, cache2 = multi_headed_attention(params, xb, xb, xb, n_head,
                                          mask=mask2, cache=cache)
    jax.block_until_ready(out2)
    jax.block_until_ready(cache2)
    assert out2.shape == (1, T1, n_feat)
    assert cache2.shape == (1, n_head, cache_t + T1, 2 * dk)
    ref2 = _reference_mha(raw, xb, xb, xb, n_head, mask=mask2, cache=cache)
    assert bool(jnp.allclose(out2.astype(jnp.float32), ref2, rtol=5e-2, atol=5e-2))

    print("KERNEL_OK")
</pallas_src>

<mosaic_0001>
module attributes {stable_mosaic.version = 11 : i64} {
  func.func @_linear_kernel(%arg0: i32, %arg1: memref<16x32xf32, #tpu.memory_space<vmem>>, %arg2: memref<32x32xbf16, #tpu.memory_space<vmem>>, %arg3: memref<1x32xf32, #tpu.memory_space<vmem>>, %arg4: memref<16x32xbf16, #tpu.memory_space<vmem>>) attributes {dimension_semantics = [#tpu.dimension_semantics<parallel>], iteration_bounds = array<i64: 1>, scalar_prefetch = 0 : i64, scratch_operands = 0 : i64, tpu.core_type = #tpu.core_type<tc>, window_params = [{transform_indices = @transform_0, window_bounds = array<i64: 16, 32>}, {pipeline_mode = #tpu.pipeline_mode<synchronous>, transform_indices = @transform_1, window_bounds = array<i64: 32, 32>}, {pipeline_mode = #tpu.pipeline_mode<synchronous>, transform_indices = @transform_2, window_bounds = array<i64: 1, 32>}, {transform_indices = @transform_3, window_bounds = array<i64: 16, 32>}]} {
    %c0 = arith.constant 0 : index
    %c0_0 = arith.constant 0 : index
    %0 = vector.load %arg1[%c0, %c0_0] : memref<16x32xf32, #tpu.memory_space<vmem>>, vector<16x32xf32>
    %1 = arith.truncf %0 : vector<16x32xf32> to vector<16x32xbf16>
    %c0_1 = arith.constant 0 : index
    %c0_2 = arith.constant 0 : index
    %2 = vector.load %arg2[%c0_1, %c0_2] : memref<32x32xbf16, #tpu.memory_space<vmem>>, vector<32x32xbf16>
    %cst = arith.constant dense<0.000000e+00> : vector<16x32xf32>
    %3 = tpu.matmul %1, %2, %cst {dimension_numbers = #tpu.dot_dimension_numbers<[1], [0], [0], [1], [0, 0, 1, 1], [], []>} : vector<16x32xbf16>, vector<32x32xbf16>, vector<16x32xf32> -> vector<16x32xf32>
    %c0_3 = arith.constant 0 : index
    %c0_4 = arith.constant 0 : index
    %4 = vector.load %arg3[%c0_3, %c0_4] : memref<1x32xf32, #tpu.memory_space<vmem>>, vector<1x32xf32>
    %5 = vector.broadcast %4 : vector<1x32xf32> to vector<16x32xf32>
    %6 = arith.addf %3, %5 : vector<16x32xf32>
    %7 = arith.truncf %6 : vector<16x32xf32> to vector<16x32xbf16>
    %c0_5 = arith.constant 0 : index
    %c0_6 = arith.constant 0 : index
    %8 = vector.load %arg4[%c0_5, %c0_6] : memref<16x32xbf16, #tpu.memory_space<vmem>>, vector<16x32xbf16>
    tpu.vector_store %arg4[%c0_5, %c0_6], %7 {strides = array<i32>} : memref<16x32xbf16, #tpu.memory_space<vmem>>, vector<16x32xbf16>,
    return
  }
  func.func @transform_0(%arg0: i32) -> (i32, i32) {
    %c0_i32 = arith.constant 0 : i32
    %c0_i32_0 = arith.constant 0 : i32
    return %arg0, %c0_i32 : i32, i32
  }
  func.func @transform_1(%arg0: i32) -> (i32, i32) {
    %c0_i32 = arith.constant 0 : i32
    %c0_i32_0 = arith.constant 0 : i32
    %c0_i32_1 = arith.constant 0 : i32
    return %c0_i32, %c0_i32_0 : i32, i32
  }
  func.func @transform_2(%arg0: i32) -> (i32, i32) {
    %c0_i32 = arith.constant 0 : i32
    %c0_i32_0 = arith.constant 0 : i32
    %c0_i32_1 = arith.constant 0 : i32
    return %c0_i32, %c0_i32_0 : i32, i32
  }
  func.func @transform_3(%arg0: i32) -> (i32, i32) {
    %c0_i32 = arith.constant 0 : i32
    %c0_i32_0 = arith.constant 0 : i32
    return %arg0, %c0_i32 : i32, i32
  }
}

</mosaic_0001>

<llo_original>
// kernel: tpu_custom_call.1
$region0: #{tpu_custom_call.1}
  #allocation0 [shape = 'u32[]', space=smem, size = 0x4, offset = 0x4, fixed_abs, tag = 'smem constant byte address 0x4 - core index']
  #allocation1 [shape = 'u32[144,128]{1,0:T(1,128)}', space=vmem, size = 0x12000, scoped, tag = 'internal scratch']
  %s0 = inlined_call_operand.hbm [shape: f32[16,32], index: 0, kind: input, shape index: {}]
  %s1 = inlined_call_operand.hbm [shape: bf16[32,32], index: 1, kind: input, shape index: {}]
  %s2 = inlined_call_operand.vmem [shape: f32[1,32], index: 2, kind: input, shape index: {}]
  %s3 = inlined_call_operand.hbm [shape: bf16[16,32], index: 3, kind: output, shape index: {}]
  %s4 = sld [smem:[#allocation0]]
  $region30: #{tpu_custom_call.1} parent=0
    _
  %s6 = ssub.s32 1, %s4
  %s7 = scalar_select 0, %s6, %s4
  $region1: #{tpu_custom_call.1} parent=0
    #allocation2 [shape = 'u8[8192]{0}', space=vmem, size = 0x2000, scoped, tag = 'input window, operand 0, single buffered']
    #allocation3 [shape = 's32[1]{0}', space=sflag, size = 0x4, scoped, tag = 'scoped memory for tpu_custom_call.1']
    #allocation4 [shape = 's32[1]{0}', space=sflag, size = 0x4, scoped, tag = 'scoped memory for tpu_custom_call.1']
    #allocation5 [shape = 'u8[8192]{0}', space=vmem, size = 0x2000, scoped, tag = 'input window, operand 1, single buffered']
    #allocation6 [shape = 's32[1]{0}', space=sflag, size = 0x4, scoped, tag = 'scoped memory for tpu_custom_call.1']
    #allocation7 [shape = 'u8[4096]{0}', space=vmem, size = 0x1000, scoped, tag = 'output window, operand 0, single buffered']
    %8 = vsyncpa [#allocation3], 0
    %9 = vsyncpa [#allocation6], 0
    %10 = vsyncpa [#allocation4], 0
    // Predicated region
    $region2: #{tpu_custom_call.1} parent=1 // pred_check
      _
    $region3: #{tpu_custom_call.1} parent=1 // pred_check_branch
      %12 = sbr.rel (0) target = $region5
    $region4: #{tpu_custom_call.1} parent=1 // pred_region
      %s14 = ssub.s32 256, 256
      %15 = vsyncadd [#allocation3], %s14
      %s16 = sshll.u32 [#allocation2], 4
      %s17 = int_to_ptr.vmem [resolvable:$true] %s16
      %22 = dma.hbm_to_vmem [thread:$0]  %s0, 256, %s17, [#allocation3], 128, 128, 8
    $region5: #{tpu_custom_call.1} parent=1 // pred_fallthru
      _
    // Predicated region
    $region6: #{tpu_custom_call.1} parent=1 // pred_check
      _
    $region7: #{tpu_custom_call.1} parent=1 // pred_check_branch
      %24 = sbr.rel (0) target = $region9
    $region8: #{tpu_custom_call.1} parent=1 // pred_region
      %s26 = ssub.s32 256, 256
      %27 = vsyncadd [#allocation6], %s26
      %s28 = sshll.u32 [#allocation5], 4
      %s29 = int_to_ptr.vmem [resolvable:$true] %s28
      %34 = dma.hbm_to_vmem [thread:$0]  %s1, 256, %s29, [#allocation6], 64, 64, 4
    $region9: #{tpu_custom_call.1} parent=1 // pred_fallthru
      _
    // Predicated region
    $region10: #{tpu_custom_call.1} parent=1 // pred_check
      _
    $region11: #{tpu_custom_call.1} parent=1 // pred_check_branch
      %36 = sbr.rel (0) target = $region13
    $region12: #{tpu_custom_call.1} parent=1 // pred_region
      _
    $region13: #{tpu_custom_call.1} parent=1 // pred_fallthru
      _
    // Predicated region
    $region14: #{tpu_custom_call.1} parent=1 // pred_check
      _
    $region15: #{tpu_custom_call.1} parent=1 // pred_check_branch
      %38 = sbr.rel (0) target = $region17
    $region16: #{tpu_custom_call.1} parent=1 // pred_region
      %39 = dma.done [#allocation3], 256
    $region17: #{tpu_custom_call.1} parent=1 // pred_fallthru
      _
    // Predicated region
    $region18: #{tpu_custom_call.1} parent=1 // pred_check
      _
    $region19: #{tpu_custom_call.1} parent=1 // pred_check_branch
      %41 = sbr.rel (0) target = $region21
    $region20: #{tpu_custom_call.1} parent=1 // pred_region
      %42 = dma.done [#allocation6], 256
    $region21: #{tpu_custom_call.1} parent=1 // pred_fallthru
      _
    %v44 = vld [vmem:[#allocation2] sm:$0xff]
    %v45 = vld [vmem:[#allocation2 + $0x8] sm:$0xff]
    %v46 = vpack.c.bf16 %v45, %v44
    %v47 = vld [vmem:[#allocation5] sm:$0xf]
    %v48 = vld [vmem:[#allocation5 + $0x4] sm:$0xf]
    %v49 = vld [vmem:[#allocation5 + $0x8] sm:$0xf]
    %v50 = vld [vmem:[#allocation5 + $0xc] sm:$0xf]
    %v51 = vld [vmem:[%s2] sm:$0x1]
    %v53 = vlaneseq
    %v54 = vshrl.u32 %v53, 7
    %v55 = vsub.s32 0, %v54
    %v56 = vrot.slane %v51, %v55
    %v62 = vunpack.c.l.b16 %v47
    %v63 = vunpack.c.l.b16 %v48
    %v64 = vunpack.c.l.b16 %v49
    %v65 = vunpack.c.l.b16 %v50
    %v66 = vpack.c.b16 %v63, %v62
    %v67 = vpack.c.b16 %v65, %v64
    %vm70 = vcmask 261120
    %v72 = vsel %vm70, %v46, 0
    %74 = vmatprep.subr.bf16.mxu0 0
    %75 = vmatpush1.bf16.msra.mxu0 0
    %76 = vmatprep.subr.bf16.mxu0 0
    %77 = vmatpush1.bf16.msra.mxu0 0
    %78 = vmatprep.subr.bf16.mxu0 0
    %79 = vmatpush1.bf16.msra.mxu0 0
    %80 = vmatprep.subr.bf16.mxu0 0
    %81 = vmatpush1.bf16.msra.mxu0 0
    %82 = vmatprep.subr.bf16.mxu0 0
    %83 = vmatpush1.bf16.msra.mxu0 0
    %84 = vmatprep.subr.bf16.mxu0 0
    %85 = vmatpush1.bf16.msra.mxu0 0
    %86 = vmatprep.subr.bf16.mxu0 0
    %87 = vmatpush1.bf16.msra.mxu0 %v67
    %88 = vmatprep.subr.bf16.mxu0 0
    %89 = vmatpush1.bf16.msra.mxu0 %v66
    %90 = vmatprep.subr.bf16.mxu0 0
    %91 = vmatpush2.bf16.msra.mxu0 0
    %92 = vmatprep.subr.bf16.mxu0 0
    %93 = vmatpush2.bf16.msra.mxu0 0
    %94 = vmatprep.subr.bf16.mxu0 0
    %95 = vmatpush2.bf16.msra.mxu0 0
    %96 = vmatprep.subr.bf16.mxu0 0
    %97 = vmatpush2.bf16.msra.mxu0 0
    %98 = vmatprep.subr.bf16.mxu0 0
    %99 = vmatpush2.bf16.msra.mxu0 0
    %100 = vmatprep.subr.bf16.mxu0 0
    %101 = vmatpush2.bf16.msra.mxu0 0
    %102 = vmatprep.subr.bf16.mxu0 0
    %103 = vmatpush2.bf16.msra.mxu0 0
    %104 = vmatprep.subr.bf16.mxu0 0
    %105 = vmatpush2.bf16.msra.mxu0 0
    %106 = vmatprep.mubr.bf16.mxu0 0
    %107 = vmatmul.mubr.bf16.gmra.mxu0 %v72
    %v108 = vpop.f32.mrf.mxu0
    %v109 = vadd.f32 %v56, %v108
    %v110 = vpop.f32.mrf.mxu0
    %v111 = vpop.f32.mrf.mxu0
    %v112 = vadd.f32 %v56, %v111
    %v113 = vpop.f32.mrf.mxu0
    %114 = vdwg.mxu0
    %v115 = vpack.c.bf16 %v112, %v109
    %v117 = vunpack.c.l.b16 %v115
    %v118 = vunpack.c.h.b16 %v115
    %v119 = vpack.c.b16 %v117, %v117
    %v120 = vpack.c.b16 %v118, %v118
    %vm123 = vcmask 257024
    %124 = vst.msk [vmem:[#allocation7] sm:$0xf] %vm123, %v119
    %125 = vst.msk [vmem:[#allocation7 + $0x4] sm:$0xf] %vm123, %v120
    // Predicated region
    $region22: #{tpu_custom_call.1} parent=1 // pred_check
      _
    $region23: #{tpu_custom_call.1} parent=1 // pred_check_branch
      %127 = sbr.rel (0) target = $region25
    $region24: #{tpu_custom_call.1} parent=1 // pred_region
      %s129 = ssub.s32 128, 128
      %130 = vsyncadd [#allocation4], %s129
      %s131 = sshll.u32 [#allocation7], 4
      %s132 = int_to_ptr.vmem [resolvable:$true] %s131
      %137 = dma.vmem_to_hbm [thread:$0]  %s132, 128, %s3, [#allocation4], 64, 64, 4
    $region25: #{tpu_custom_call.1} parent=1 // pred_fallthru
      _
    // Predicated region
    $region26: #{tpu_custom_call.1} parent=1 // pred_check
      _
    $region27: #{tpu_custom_call.1} parent=1 // pred_check_branch
      %139 = sbr.rel (0) target = $region29
    $region28: #{tpu_custom_call.1} parent=1 // pred_region
      %140 = dma.done [#allocation4], 128
    $region29: #{tpu_custom_call.1} parent=1 // pred_fallthru
      _
    %141 = vsyncpa [#allocation3], 1
    %142 = vsyncpa [#allocation6], 1
    %143 = vsyncpa [#allocation4], 1

</llo_original>
